<compile_context>
chip_gen: v7x
topology: tpu7x:2x2x1
jax: 0.10.0
libtpu: 0.0.40
codegen_flags: <defaults>
</compile_context>

<pallas_src>
import functools

import jax
import jax.numpy as jnp
from jax import lax
from jax.experimental import pallas as pl
from jax.experimental.pallas import tpu as pltpu


def _cdiv(a, b):
    return -(-a // b)


def _round_up(x, m):
    return (x + m - 1) // m * m


def _fused_loss(pi, pj, ni, nj, sm, rela):
    """softplus(relaError + linkError) with the two D-axis reductions fused.

    a = pj - pi, b = nj - ni, d1 = a - b, d2 = a + b
      relaError = sum((nj - ni - pj + pi) * rela) = sum(-d1 * rela)
      linkError = sum((pj - pi - nj + ni) * (pj - pi + nj - ni) * sm)
                = sum(d1 * d2 * sm)
      => relaError + linkError = sum(d1 * (d2 * sm - rela))
    """
    a = pj - pi
    b = nj - ni
    d1 = a - b
    d2 = a + b
    t = jnp.sum(d1 * (d2 * sm - rela), axis=1, keepdims=True)
    # numerically-stable softplus
    return jnp.maximum(t, 0.0) + jnp.log1p(jnp.exp(-jnp.abs(t)))


def _beam_resident_kernel(idx_ref, link_ref, rela_ref, node_ref, loss_ref,
                          *scratch, tb, D, n_rel):
    """Node table resident in VMEM; the 4 lookups/row are gathered in-kernel.

    idx_ref : SMEM (5, Bp) int32   rows = [idx_k, pos_i, pos_j, neg_i, neg_j]
    link_ref: VMEM (R, D)          softmax(link_embedding), resident
    rela_ref: VMEM (R, D)          rela_embedding, resident
    node_ref: VMEM (N, D)          node_embedding, resident
    loss_ref: VMEM (tb, 1) f32     output block
    scratch : (8, 4*D) node-dtype staging buf [+ (8, 2*D) f32 when R > 1]
    """
    gbuf = scratch[0]
    lrbuf = scratch[1] if n_rel > 1 else None

    row0 = pl.program_id(0) * tb

    if n_rel == 1:
        # Single relation: hoist the softmaxed link row and the rela row out of
        # the row loop entirely (no per-row link/rela work at all).
        sm_tile = jnp.broadcast_to(link_ref[...].astype(jnp.float32), (8, D))
        rela_tile = jnp.broadcast_to(rela_ref[...].astype(jnp.float32), (8, D))

    def group(g, carry):
        base = row0 + g * 8
        # Gather 8 batch rows of embeddings into a lane-dense staging buffer
        # (one dynamic-sublane load + one static store per lookup).
        for j in range(8):                      # static unroll
            r = base + j
            for c in range(4):                  # pi, pj, ni, nj
                nid = idx_ref[1 + c, r]
                gbuf[j:j + 1, c * D:(c + 1) * D] = node_ref[pl.ds(nid, 1), :]
            if n_rel > 1:
                k = idx_ref[0, r]
                lrbuf[j:j + 1, 0:D] = link_ref[pl.ds(k, 1), :].astype(jnp.float32)
                lrbuf[j:j + 1, D:2 * D] = rela_ref[pl.ds(k, 1), :].astype(jnp.float32)

        blk = gbuf[...].astype(jnp.float32)      # (8, 4*D)
        pi = blk[:, 0 * D:1 * D]
        pj = blk[:, 1 * D:2 * D]
        ni = blk[:, 2 * D:3 * D]
        nj = blk[:, 3 * D:4 * D]
        if n_rel > 1:
            lr = lrbuf[...]
            sm, rela = lr[:, 0:D], lr[:, D:2 * D]
        else:
            sm, rela = sm_tile, rela_tile

        off = pl.multiple_of(g * 8, 8)
        loss_ref[pl.ds(off, 8), :] = _fused_loss(pi, pj, ni, nj, sm, rela)
        return carry

    lax.fori_loop(0, tb // 8, group, 0)


def _beam_slab_kernel(idx_ref, link_ref, rela_ref, nodes_ref, loss_ref,
                      *scratch, tb, D, n_rel):
    """Fallback for node tables too large for VMEM: the [tb, 4*D] row slab is
    gathered by XLA in the wrapper and streamed; link/rela stay resident."""
    blk = nodes_ref[...].astype(jnp.float32)     # (tb, 4*D)
    pi = blk[:, 0 * D:1 * D]
    pj = blk[:, 1 * D:2 * D]
    ni = blk[:, 2 * D:3 * D]
    nj = blk[:, 3 * D:4 * D]

    if n_rel == 1:
        sm = link_ref[...].astype(jnp.float32)   # (1, D) -> broadcast in math
        rela = rela_ref[...].astype(jnp.float32)
    else:
        lrbuf = scratch[0]
        row0 = pl.program_id(0) * tb

        def fill(r, carry):
            k = idx_ref[0, row0 + r]
            lrbuf[pl.ds(r, 1), 0:D] = link_ref[pl.ds(k, 1), :].astype(jnp.float32)
            lrbuf[pl.ds(r, 1), D:2 * D] = rela_ref[pl.ds(k, 1), :].astype(jnp.float32)
            return carry

        lax.fori_loop(0, tb, fill, 0)
        lr = lrbuf[...]
        sm, rela = lr[:, 0:D], lr[:, D:2 * D]

    loss_ref[...] = _fused_loss(pi, pj, ni, nj, sm, rela)


def beam_forward_pallas(batch_vector, node_emb, rela_emb, link_emb, *,
                        stream_dtype=None,
                        vmem_resident_limit_bytes=8 * 1024 * 1024):
    """Forward pass of BEAM.

    batch_vector: [B, 5] integer rows [idx_k, pos_head, pos_tail, neg_head, neg_tail].
    """
    B = batch_vector.shape[0]
    N, D = node_emb.shape
    R = link_emb.shape[0]

    # Per-relation softmax hoisted out of the per-row path (R << B).
    sm_link = jax.nn.softmax(link_emb.astype(jnp.float32), axis=1)       # [R, D]

    # int32 indices, clipped so a bad id can never become an unchecked OOB
    # VMEM read inside the kernel (the PyTorch Embedding would raise instead).
    bv = batch_vector.astype(jnp.int32)
    idx_k = jnp.clip(bv[:, 0], 0, R - 1)
    nid = jnp.clip(bv[:, 1:5], 0, N - 1)

    # Keep the node table resident in VMEM when it fits (with 2x headroom for
    # double-buffered blocks against the v7x 32 MiB scoped VMEM budget).
    table_bytes = N * D * node_emb.dtype.itemsize
    resident = table_bytes <= vmem_resident_limit_bytes

    # Tile size: an EVEN number of grid steps (v7x shards the parallel axis
    # over its 2 TensorCores) with minimal padding; >= ~512 rows per step so
    # the ~0.35 us/step pipeline overhead stays negligible.
    rows_per_step = 512 if resident else 1024
    steps = 1 if B <= 8 else 2 * _cdiv(B, 2 * rows_per_step)
    tb = _round_up(_cdiv(B, steps), 8)
    Bp = steps * tb

    # Prefetched index table: long axis LAST so SMEM pads to (8, Bp) words,
    # not (Bp, 128) words.
    idx_all = jnp.concatenate([idx_k[None, :], nid.T], axis=0)           # [5, B]
    if Bp != B:
        idx_all = jnp.pad(idx_all, ((0, 0), (0, Bp - B)))

    link_spec = pl.BlockSpec((R, D), lambda i, idx: (0, 0))              # resident
    rela_spec = pl.BlockSpec((R, D), lambda i, idx: (0, 0))              # resident
    out_spec = pl.BlockSpec((tb, 1), lambda i, idx: (i, 0))

    if resident:
        kernel = functools.partial(_beam_resident_kernel, tb=tb, D=D, n_rel=R)
        node_spec = pl.BlockSpec((N, D), lambda i, idx: (0, 0))          # resident
        scratch = [pltpu.VMEM((8, 4 * D), node_emb.dtype)]
        if R > 1:
            scratch.append(pltpu.VMEM((8, 2 * D), jnp.float32))
        third_input = node_emb
    else:
        # TODO(synk): replace this XLA gather with a manual double-buffered
        # pltpu.make_async_copy gather from an HBM (pl.ANY) node table.
        kernel = functools.partial(_beam_slab_kernel, tb=tb, D=D, n_rel=R)
        nodes = jnp.take(node_emb, nid, axis=0).reshape(B, 4 * D)        # [B, 4*D]
        if stream_dtype is not None:
            nodes = nodes.astype(stream_dtype)   # e.g. bf16 halves the HBM stream
        if Bp != B:
            nodes = jnp.pad(nodes, ((0, Bp - B), (0, 0)))
        node_spec = pl.BlockSpec((tb, 4 * D), lambda i, idx: (i, 0))
        scratch = [pltpu.VMEM((tb, 2 * D), jnp.float32)] if R > 1 else []
        third_input = nodes

    loss = pl.pallas_call(
        kernel,
        out_shape=jax.ShapeDtypeStruct((Bp, 1), jnp.float32),
        grid_spec=pltpu.PrefetchScalarGridSpec(
            num_scalar_prefetch=1,
            grid=(steps,),
            in_specs=[link_spec, rela_spec, node_spec],
            out_specs=out_spec,
            scratch_shapes=scratch,
        ),
        compiler_params=pltpu.CompilerParams(
            dimension_semantics=("parallel",),
            vmem_limit_bytes=32 * 1024 * 1024,
        ),
    )(idx_all, sm_link, rela_emb, third_input)

    return loss[:B, 0]                                                   # [B]


def beam_forward_ref(batch_vector, node_emb, rela_emb, link_emb):
    """Pure-JAX reference matching the PyTorch forward."""
    idx_k = batch_vector[:, 0]
    link = jax.nn.softmax(jnp.take(link_emb, idx_k, axis=0).astype(jnp.float32), axis=1)
    rela = jnp.take(rela_emb, idx_k, axis=0).astype(jnp.float32)
    pi = jnp.take(node_emb, batch_vector[:, 1], axis=0).astype(jnp.float32)
    pj = jnp.take(node_emb, batch_vector[:, 2], axis=0).astype(jnp.float32)
    ni = jnp.take(node_emb, batch_vector[:, 3], axis=0).astype(jnp.float32)
    nj = jnp.take(node_emb, batch_vector[:, 4], axis=0).astype(jnp.float32)
    rela_err = jnp.sum((nj - ni - pj + pi) * rela, axis=1)
    link_err = jnp.sum((pj - pi - nj + ni) * (pj - pi + nj - ni) * link, axis=1)
    return jax.nn.softplus(rela_err + link_err)


if __name__ == "__main__":
    # Small synthetic setup consistent with the module:
    #   node_embedding: [num_nodes, D], rela_embedding: [1, D], link_embedding: [1, D]
    num_nodes = 16
    D = 128    # "dimension" in the module
    B = 24     # exercises a 2-step grid + a padded tail

    key = jax.random.PRNGKey(0)
    k_node, k_rela, k_link, k_idx = jax.random.split(key, 4)

    node_emb = jax.random.normal(k_node, (num_nodes, D), dtype=jnp.float32)
    rela_emb = jax.random.normal(k_rela, (1, D), dtype=jnp.float32)
    link_emb = jax.random.normal(k_link, (1, D), dtype=jnp.float32)

    # batchVector: column 0 is always 0 (single relation), columns 1..4 are node ids.
    node_ids = jax.random.randint(k_idx, (B, 4), 0, num_nodes, dtype=jnp.int32)
    batch_vector = jnp.concatenate(
        [jnp.zeros((B, 1), dtype=jnp.int32), node_ids], axis=1)          # [B, 5]

    ref = beam_forward_ref(batch_vector, node_emb, rela_emb, link_emb)

    # Primary path: VMEM-resident node table with the gather fused in-kernel.
    loss = jax.block_until_ready(
        beam_forward_pallas(batch_vector, node_emb, rela_emb, link_emb))
    assert loss.shape == (B,), loss.shape
    assert jnp.allclose(loss, ref, atol=1e-4, rtol=1e-4), (loss, ref)

    # Fallback path (node table "too big" for VMEM): XLA-gathered slab stream.
    loss_fb = jax.block_until_ready(
        beam_forward_pallas(batch_vector, node_emb, rela_emb, link_emb,
                            vmem_resident_limit_bytes=0))
    assert jnp.allclose(loss_fb, ref, atol=1e-4, rtol=1e-4), (loss_fb, ref)

    print("KERNEL_OK")
</pallas_src>

<mosaic_0001>
module attributes {stable_mosaic.version = 11 : i64} {
  func.func @_beam_resident_kernel(%arg0: i32, %arg1: memref<5x32xi32, #tpu.memory_space<smem>>, %arg2: memref<1x128xf32, #tpu.memory_space<vmem>>, %arg3: memref<1x128xf32, #tpu.memory_space<vmem>>, %arg4: memref<16x128xf32, #tpu.memory_space<vmem>>, %arg5: memref<16x1xf32, #tpu.memory_space<vmem>>, %arg6: memref<8x512xf32, #tpu.memory_space<vmem>>) attributes {dimension_semantics = [#tpu.dimension_semantics<parallel>], iteration_bounds = array<i64: 2>, scalar_prefetch = 1 : i64, scratch_operands = 1 : i64, tpu.core_type = #tpu.core_type<tc>, window_params = [{pipeline_mode = #tpu.pipeline_mode<synchronous>, transform_indices = @transform_0, window_bounds = array<i64: 1, 128>}, {pipeline_mode = #tpu.pipeline_mode<synchronous>, transform_indices = @transform_1, window_bounds = array<i64: 1, 128>}, {pipeline_mode = #tpu.pipeline_mode<synchronous>, transform_indices = @transform_2, window_bounds = array<i64: 16, 128>}, {transform_indices = @transform_3, window_bounds = array<i64: 16, 1>}]} {
    %c16_i32 = arith.constant 16 : i32
    %0 = arith.muli %arg0, %c16_i32 : i32
    %c0 = arith.constant 0 : index
    %c0_0 = arith.constant 0 : index
    %1 = vector.load %arg2[%c0, %c0_0] : memref<1x128xf32, #tpu.memory_space<vmem>>, vector<1x128xf32>
    %2 = vector.shape_cast %1 : vector<1x128xf32> to vector<1x128xf32>
    %3 = vector.broadcast %2 : vector<1x128xf32> to vector<8x128xf32>
    %c0_1 = arith.constant 0 : index
    %c0_2 = arith.constant 0 : index
    %4 = vector.load %arg3[%c0_1, %c0_2] : memref<1x128xf32, #tpu.memory_space<vmem>>, vector<1x128xf32>
    %5 = vector.shape_cast %4 : vector<1x128xf32> to vector<1x128xf32>
    %6 = vector.broadcast %5 : vector<1x128xf32> to vector<8x128xf32>
    %c0_i32 = arith.constant 0 : i32
    %c2_i32 = arith.constant 2 : i32
    %7 = arith.addi %c0_i32, %c2_i32 : i32
    %c1_i32 = arith.constant 1 : i32
    scf.for %arg7 = %c0_i32 to %7 step %c1_i32  : i32 {
      %c8_i32 = arith.constant 8 : i32
      %8 = arith.muli %arg7, %c8_i32 : i32
      %9 = arith.addi %0, %8 : i32
      %c0_i32_4 = arith.constant 0 : i32
      %10 = arith.addi %9, %c0_i32_4 : i32
      %c1 = arith.constant 1 : index
      %11 = arith.index_cast %10 : i32 to index
      %12 = memref.load %arg1[%c1, %11] : memref<5x32xi32, #tpu.memory_space<smem>>
      %13 = arith.index_cast %12 : i32 to index
      %c0_5 = arith.constant 0 : index
      %14 = vector.load %arg4[%13, %c0_5] : memref<16x128xf32, #tpu.memory_space<vmem>>, vector<1x128xf32>
      %c0_6 = arith.constant 0 : index
      %c0_7 = arith.constant 0 : index
      %15 = vector.load %arg6[%c0_6, %c0_7] : memref<8x512xf32, #tpu.memory_space<vmem>>, vector<1x128xf32>
      tpu.vector_store %arg6[%c0_6, %c0_7], %14 {strides = array<i32>} : memref<8x512xf32, #tpu.memory_space<vmem>>, vector<1x128xf32>,
      %c2 = arith.constant 2 : index
      %16 = arith.index_cast %10 : i32 to index
      %17 = memref.load %arg1[%c2, %16] : memref<5x32xi32, #tpu.memory_space<smem>>
      %18 = arith.index_cast %17 : i32 to index
      %c0_8 = arith.constant 0 : index
      %19 = vector.load %arg4[%18, %c0_8] : memref<16x128xf32, #tpu.memory_space<vmem>>, vector<1x128xf32>
      %c0_9 = arith.constant 0 : index
      %c128 = arith.constant 128 : index
      %20 = vector.load %arg6[%c0_9, %c128] : memref<8x512xf32, #tpu.memory_space<vmem>>, vector<1x128xf32>
      tpu.vector_store %arg6[%c0_9, %c128], %19 {strides = array<i32>} : memref<8x512xf32, #tpu.memory_space<vmem>>, vector<1x128xf32>,
      %c3 = arith.constant 3 : index
      %21 = arith.index_cast %10 : i32 to index
      %22 = memref.load %arg1[%c3, %21] : memref<5x32xi32, #tpu.memory_space<smem>>
      %23 = arith.index_cast %22 : i32 to index
      %c0_10 = arith.constant 0 : index
      %24 = vector.load %arg4[%23, %c0_10] : memref<16x128xf32, #tpu.memory_space<vmem>>, vector<1x128xf32>
      %c0_11 = arith.constant 0 : index
      %c256 = arith.constant 256 : index
      %25 = vector.load %arg6[%c0_11, %c256] : memref<8x512xf32, #tpu.memory_space<vmem>>, vector<1x128xf32>
      tpu.vector_store %arg6[%c0_11, %c256], %24 {strides = array<i32>} : memref<8x512xf32, #tpu.memory_space<vmem>>, vector<1x128xf32>,
      %c4 = arith.constant 4 : index
      %26 = arith.index_cast %10 : i32 to index
      %27 = memref.load %arg1[%c4, %26] : memref<5x32xi32, #tpu.memory_space<smem>>
      %28 = arith.index_cast %27 : i32 to index
      %c0_12 = arith.constant 0 : index
      %29 = vector.load %arg4[%28, %c0_12] : memref<16x128xf32, #tpu.memory_space<vmem>>, vector<1x128xf32>
      %c0_13 = arith.constant 0 : index
      %c384 = arith.constant 384 : index
      %30 = vector.load %arg6[%c0_13, %c384] : memref<8x512xf32, #tpu.memory_space<vmem>>, vector<1x128xf32>
      tpu.vector_store %arg6[%c0_13, %c384], %29 {strides = array<i32>} : memref<8x512xf32, #tpu.memory_space<vmem>>, vector<1x128xf32>,
      %c1_i32_14 = arith.constant 1 : i32
      %31 = arith.addi %9, %c1_i32_14 : i32
      %c1_15 = arith.constant 1 : index
      %32 = arith.index_cast %31 : i32 to index
      %33 = memref.load %arg1[%c1_15, %32] : memref<5x32xi32, #tpu.memory_space<smem>>
      %34 = arith.index_cast %33 : i32 to index
      %c0_16 = arith.constant 0 : index
      %35 = vector.load %arg4[%34, %c0_16] : memref<16x128xf32, #tpu.memory_space<vmem>>, vector<1x128xf32>
      %c1_17 = arith.constant 1 : index
      %c0_18 = arith.constant 0 : index
      %36 = vector.load %arg6[%c1_17, %c0_18] : memref<8x512xf32, #tpu.memory_space<vmem>>, vector<1x128xf32>
      tpu.vector_store %arg6[%c1_17, %c0_18], %35 {strides = array<i32>} : memref<8x512xf32, #tpu.memory_space<vmem>>, vector<1x128xf32>,
      %c2_19 = arith.constant 2 : index
      %37 = arith.index_cast %31 : i32 to index
      %38 = memref.load %arg1[%c2_19, %37] : memref<5x32xi32, #tpu.memory_space<smem>>
      %39 = arith.index_cast %38 : i32 to index
      %c0_20 = arith.constant 0 : index
      %40 = vector.load %arg4[%39, %c0_20] : memref<16x128xf32, #tpu.memory_space<vmem>>, vector<1x128xf32>
      %c1_21 = arith.constant 1 : index
      %c128_22 = arith.constant 128 : index
      %41 = vector.load %arg6[%c1_21, %c128_22] : memref<8x512xf32, #tpu.memory_space<vmem>>, vector<1x128xf32>
      tpu.vector_store %arg6[%c1_21, %c128_22], %40 {strides = array<i32>} : memref<8x512xf32, #tpu.memory_space<vmem>>, vector<1x128xf32>,
      %c3_23 = arith.constant 3 : index
      %42 = arith.index_cast %31 : i32 to index
      %43 = memref.load %arg1[%c3_23, %42] : memref<5x32xi32, #tpu.memory_space<smem>>
      %44 = arith.index_cast %43 : i32 to index
      %c0_24 = arith.constant 0 : index
      %45 = vector.load %arg4[%44, %c0_24] : memref<16x128xf32, #tpu.memory_space<vmem>>, vector<1x128xf32>
      %c1_25 = arith.constant 1 : index
      %c256_26 = arith.constant 256 : index
      %46 = vector.load %arg6[%c1_25, %c256_26] : memref<8x512xf32, #tpu.memory_space<vmem>>, vector<1x128xf32>
      tpu.vector_store %arg6[%c1_25, %c256_26], %45 {strides = array<i32>} : memref<8x512xf32, #tpu.memory_space<vmem>>, vector<1x128xf32>,
      %c4_27 = arith.constant 4 : index
      %47 = arith.index_cast %31 : i32 to index
      %48 = memref.load %arg1[%c4_27, %47] : memref<5x32xi32, #tpu.memory_space<smem>>
      %49 = arith.index_cast %48 : i32 to index
      %c0_28 = arith.constant 0 : index
      %50 = vector.load %arg4[%49, %c0_28] : memref<16x128xf32, #tpu.memory_space<vmem>>, vector<1x128xf32>
      %c1_29 = arith.constant 1 : index
      %c384_30 = arith.constant 384 : index
      %51 = vector.load %arg6[%c1_29, %c384_30] : memref<8x512xf32, #tpu.memory_space<vmem>>, vector<1x128xf32>
      tpu.vector_store %arg6[%c1_29, %c384_30], %50 {strides = array<i32>} : memref<8x512xf32, #tpu.memory_space<vmem>>, vector<1x128xf32>,
      %c2_i32_31 = arith.constant 2 : i32
      %52 = arith.addi %9, %c2_i32_31 : i32
      %c1_32 = arith.constant 1 : index
      %53 = arith.index_cast %52 : i32 to index
      %54 = memref.load %arg1[%c1_32, %53] : memref<5x32xi32, #tpu.memory_space<smem>>
      %55 = arith.index_cast %54 : i32 to index
      %c0_33 = arith.constant 0 : index
      %56 = vector.load %arg4[%55, %c0_33] : memref<16x128xf32, #tpu.memory_space<vmem>>, vector<1x128xf32>
      %c2_34 = arith.constant 2 : index
      %c0_35 = arith.constant 0 : index
      %57 = vector.load %arg6[%c2_34, %c0_35] : memref<8x512xf32, #tpu.memory_space<vmem>>, vector<1x128xf32>
      tpu.vector_store %arg6[%c2_34, %c0_35], %56 {strides = array<i32>} : memref<8x512xf32, #tpu.memory_space<vmem>>, vector<1x128xf32>,
      %c2_36 = arith.constant 2 : index
      %58 = arith.index_cast %52 : i32 to index
      %59 = memref.load %arg1[%c2_36, %58] : memref<5x32xi32, #tpu.memory_space<smem>>
      %60 = arith.index_cast %59 : i32 to index
      %c0_37 = arith.constant 0 : index
      %61 = vector.load %arg4[%60, %c0_37] : memref<16x128xf32, #tpu.memory_space<vmem>>, vector<1x128xf32>
      %c2_38 = arith.constant 2 : index
      %c128_39 = arith.constant 128 : index
      %62 = vector.load %arg6[%c2_38, %c128_39] : memref<8x512xf32, #tpu.memory_space<vmem>>, vector<1x128xf32>
      tpu.vector_store %arg6[%c2_38, %c128_39], %61 {strides = array<i32>} : memref<8x512xf32, #tpu.memory_space<vmem>>, vector<1x128xf32>,
      %c3_40 = arith.constant 3 : index
      %63 = arith.index_cast %52 : i32 to index
      %64 = memref.load %arg1[%c3_40, %63] : memref<5x32xi32, #tpu.memory_space<smem>>
      %65 = arith.index_cast %64 : i32 to index
      %c0_41 = arith.constant 0 : index
      %66 = vector.load %arg4[%65, %c0_41] : memref<16x128xf32, #tpu.memory_space<vmem>>, vector<1x128xf32>
      %c2_42 = arith.constant 2 : index
      %c256_43 = arith.constant 256 : index
      %67 = vector.load %arg6[%c2_42, %c256_43] : memref<8x512xf32, #tpu.memory_space<vmem>>, vector<1x128xf32>
      tpu.vector_store %arg6[%c2_42, %c256_43], %66 {strides = array<i32>} : memref<8x512xf32, #tpu.memory_space<vmem>>, vector<1x128xf32>,
      %c4_44 = arith.constant 4 : index
      %68 = arith.index_cast %52 : i32 to index
      %69 = memref.load %arg1[%c4_44, %68] : memref<5x32xi32, #tpu.memory_space<smem>>
      %70 = arith.index_cast %69 : i32 to index
      %c0_45 = arith.constant 0 : index
      %71 = vector.load %arg4[%70, %c0_45] : memref<16x128xf32, #tpu.memory_space<vmem>>, vector<1x128xf32>
      %c2_46 = arith.constant 2 : index
      %c384_47 = arith.constant 384 : index
      %72 = vector.load %arg6[%c2_46, %c384_47] : memref<8x512xf32, #tpu.memory_space<vmem>>, vector<1x128xf32>
      tpu.vector_store %arg6[%c2_46, %c384_47], %71 {strides = array<i32>} : memref<8x512xf32, #tpu.memory_space<vmem>>, vector<1x128xf32>,
      %c3_i32 = arith.constant 3 : i32
      %73 = arith.addi %9, %c3_i32 : i32
      %c1_48 = arith.constant 1 : index
      %74 = arith.index_cast %73 : i32 to index
      %75 = memref.load %arg1[%c1_48, %74] : memref<5x32xi32, #tpu.memory_space<smem>>
      %76 = arith.index_cast %75 : i32 to index
      %c0_49 = arith.constant 0 : index
      %77 = vector.load %arg4[%76, %c0_49] : memref<16x128xf32, #tpu.memory_space<vmem>>, vector<1x128xf32>
      %c3_50 = arith.constant 3 : index
      %c0_51 = arith.constant 0 : index
      %78 = vector.load %arg6[%c3_50, %c0_51] : memref<8x512xf32, #tpu.memory_space<vmem>>, vector<1x128xf32>
      tpu.vector_store %arg6[%c3_50, %c0_51], %77 {strides = array<i32>} : memref<8x512xf32, #tpu.memory_space<vmem>>, vector<1x128xf32>,
      %c2_52 = arith.constant 2 : index
      %79 = arith.index_cast %73 : i32 to index
      %80 = memref.load %arg1[%c2_52, %79] : memref<5x32xi32, #tpu.memory_space<smem>>
      %81 = arith.index_cast %80 : i32 to index
      %c0_53 = arith.constant 0 : index
      %82 = vector.load %arg4[%81, %c0_53] : memref<16x128xf32, #tpu.memory_space<vmem>>, vector<1x128xf32>
      %c3_54 = arith.constant 3 : index
      %c128_55 = arith.constant 128 : index
      %83 = vector.load %arg6[%c3_54, %c128_55] : memref<8x512xf32, #tpu.memory_space<vmem>>, vector<1x128xf32>
      tpu.vector_store %arg6[%c3_54, %c128_55], %82 {strides = array<i32>} : memref<8x512xf32, #tpu.memory_space<vmem>>, vector<1x128xf32>,
      %c3_56 = arith.constant 3 : index
      %84 = arith.index_cast %73 : i32 to index
      %85 = memref.load %arg1[%c3_56, %84] : memref<5x32xi32, #tpu.memory_space<smem>>
      %86 = arith.index_cast %85 : i32 to index
      %c0_57 = arith.constant 0 : index
      %87 = vector.load %arg4[%86, %c0_57] : memref<16x128xf32, #tpu.memory_space<vmem>>, vector<1x128xf32>
      %c3_58 = arith.constant 3 : index
      %c256_59 = arith.constant 256 : index
      %88 = vector.load %arg6[%c3_58, %c256_59] : memref<8x512xf32, #tpu.memory_space<vmem>>, vector<1x128xf32>
      tpu.vector_store %arg6[%c3_58, %c256_59], %87 {strides = array<i32>} : memref<8x512xf32, #tpu.memory_space<vmem>>, vector<1x128xf32>,
      %c4_60 = arith.constant 4 : index
      %89 = arith.index_cast %73 : i32 to index
      %90 = memref.load %arg1[%c4_60, %89] : memref<5x32xi32, #tpu.memory_space<smem>>
      %91 = arith.index_cast %90 : i32 to index
      %c0_61 = arith.constant 0 : index
      %92 = vector.load %arg4[%91, %c0_61] : memref<16x128xf32, #tpu.memory_space<vmem>>, vector<1x128xf32>
      %c3_62 = arith.constant 3 : index
      %c384_63 = arith.constant 384 : index
      %93 = vector.load %arg6[%c3_62, %c384_63] : memref<8x512xf32, #tpu.memory_space<vmem>>, vector<1x128xf32>
      tpu.vector_store %arg6[%c3_62, %c384_63], %92 {strides = array<i32>} : memref<8x512xf32, #tpu.memory_space<vmem>>, vector<1x128xf32>,
      %c4_i32 = arith.constant 4 : i32
      %94 = arith.addi %9, %c4_i32 : i32
      %c1_64 = arith.constant 1 : index
      %95 = arith.index_cast %94 : i32 to index
      %96 = memref.load %arg1[%c1_64, %95] : memref<5x32xi32, #tpu.memory_space<smem>>
      %97 = arith.index_cast %96 : i32 to index
      %c0_65 = arith.constant 0 : index
      %98 = vector.load %arg4[%97, %c0_65] : memref<16x128xf32, #tpu.memory_space<vmem>>, vector<1x128xf32>
      %c4_66 = arith.constant 4 : index
      %c0_67 = arith.constant 0 : index
      %99 = vector.load %arg6[%c4_66, %c0_67] : memref<8x512xf32, #tpu.memory_space<vmem>>, vector<1x128xf32>
      tpu.vector_store %arg6[%c4_66, %c0_67], %98 {strides = array<i32>} : memref<8x512xf32, #tpu.memory_space<vmem>>, vector<1x128xf32>,
      %c2_68 = arith.constant 2 : index
      %100 = arith.index_cast %94 : i32 to index
      %101 = memref.load %arg1[%c2_68, %100] : memref<5x32xi32, #tpu.memory_space<smem>>
      %102 = arith.index_cast %101 : i32 to index
      %c0_69 = arith.constant 0 : index
      %103 = vector.load %arg4[%102, %c0_69] : memref<16x128xf32, #tpu.memory_space<vmem>>, vector<1x128xf32>
      %c4_70 = arith.constant 4 : index
      %c128_71 = arith.constant 128 : index
      %104 = vector.load %arg6[%c4_70, %c128_71] : memref<8x512xf32, #tpu.memory_space<vmem>>, vector<1x128xf32>
      tpu.vector_store %arg6[%c4_70, %c128_71], %103 {strides = array<i32>} : memref<8x512xf32, #tpu.memory_space<vmem>>, vector<1x128xf32>,
      %c3_72 = arith.constant 3 : index
      %105 = arith.index_cast %94 : i32 to index
      %106 = memref.load %arg1[%c3_72, %105] : memref<5x32xi32, #tpu.memory_space<smem>>
      %107 = arith.index_cast %106 : i32 to index
      %c0_73 = arith.constant 0 : index
      %108 = vector.load %arg4[%107, %c0_73] : memref<16x128xf32, #tpu.memory_space<vmem>>, vector<1x128xf32>
      %c4_74 = arith.constant 4 : index
      %c256_75 = arith.constant 256 : index
      %109 = vector.load %arg6[%c4_74, %c256_75] : memref<8x512xf32, #tpu.memory_space<vmem>>, vector<1x128xf32>
      tpu.vector_store %arg6[%c4_74, %c256_75], %108 {strides = array<i32>} : memref<8x512xf32, #tpu.memory_space<vmem>>, vector<1x128xf32>,
      %c4_76 = arith.constant 4 : index
      %110 = arith.index_cast %94 : i32 to index
      %111 = memref.load %arg1[%c4_76, %110] : memref<5x32xi32, #tpu.memory_space<smem>>
      %112 = arith.index_cast %111 : i32 to index
      %c0_77 = arith.constant 0 : index
      %113 = vector.load %arg4[%112, %c0_77] : memref<16x128xf32, #tpu.memory_space<vmem>>, vector<1x128xf32>
      %c4_78 = arith.constant 4 : index
      %c384_79 = arith.constant 384 : index
      %114 = vector.load %arg6[%c4_78, %c384_79] : memref<8x512xf32, #tpu.memory_space<vmem>>, vector<1x128xf32>
      tpu.vector_store %arg6[%c4_78, %c384_79], %113 {strides = array<i32>} : memref<8x512xf32, #tpu.memory_space<vmem>>, vector<1x128xf32>,
      %c5_i32 = arith.constant 5 : i32
      %115 = arith.addi %9, %c5_i32 : i32
      %c1_80 = arith.constant 1 : index
      %116 = arith.index_cast %115 : i32 to index
      %117 = memref.load %arg1[%c1_80, %116] : memref<5x32xi32, #tpu.memory_space<smem>>
      %118 = arith.index_cast %117 : i32 to index
      %c0_81 = arith.constant 0 : index
      %119 = vector.load %arg4[%118, %c0_81] : memref<16x128xf32, #tpu.memory_space<vmem>>, vector<1x128xf32>
      %c5 = arith.constant 5 : index
      %c0_82 = arith.constant 0 : index
      %120 = vector.load %arg6[%c5, %c0_82] : memref<8x512xf32, #tpu.memory_space<vmem>>, vector<1x128xf32>
      tpu.vector_store %arg6[%c5, %c0_82], %119 {strides = array<i32>} : memref<8x512xf32, #tpu.memory_space<vmem>>, vector<1x128xf32>,
      %c2_83 = arith.constant 2 : index
      %121 = arith.index_cast %115 : i32 to index
      %122 = memref.load %arg1[%c2_83, %121] : memref<5x32xi32, #tpu.memory_space<smem>>
      %123 = arith.index_cast %122 : i32 to index
      %c0_84 = arith.constant 0 : index
      %124 = vector.load %arg4[%123, %c0_84] : memref<16x128xf32, #tpu.memory_space<vmem>>, vector<1x128xf32>
      %c5_85 = arith.constant 5 : index
      %c128_86 = arith.constant 128 : index
      %125 = vector.load %arg6[%c5_85, %c128_86] : memref<8x512xf32, #tpu.memory_space<vmem>>, vector<1x128xf32>
      tpu.vector_store %arg6[%c5_85, %c128_86], %124 {strides = array<i32>} : memref<8x512xf32, #tpu.memory_space<vmem>>, vector<1x128xf32>,
      %c3_87 = arith.constant 3 : index
      %126 = arith.index_cast %115 : i32 to index
      %127 = memref.load %arg1[%c3_87, %126] : memref<5x32xi32, #tpu.memory_space<smem>>
      %128 = arith.index_cast %127 : i32 to index
      %c0_88 = arith.constant 0 : index
      %129 = vector.load %arg4[%128, %c0_88] : memref<16x128xf32, #tpu.memory_space<vmem>>, vector<1x128xf32>
      %c5_89 = arith.constant 5 : index
      %c256_90 = arith.constant 256 : index
      %130 = vector.load %arg6[%c5_89, %c256_90] : memref<8x512xf32, #tpu.memory_space<vmem>>, vector<1x128xf32>
      tpu.vector_store %arg6[%c5_89, %c256_90], %129 {strides = array<i32>} : memref<8x512xf32, #tpu.memory_space<vmem>>, vector<1x128xf32>,
      %c4_91 = arith.constant 4 : index
      %131 = arith.index_cast %115 : i32 to index
      %132 = memref.load %arg1[%c4_91, %131] : memref<5x32xi32, #tpu.memory_space<smem>>
      %133 = arith.index_cast %132 : i32 to index
      %c0_92 = arith.constant 0 : index
      %134 = vector.load %arg4[%133, %c0_92] : memref<16x128xf32, #tpu.memory_space<vmem>>, vector<1x128xf32>
      %c5_93 = arith.constant 5 : index
      %c384_94 = arith.constant 384 : index
      %135 = vector.load %arg6[%c5_93, %c384_94] : memref<8x512xf32, #tpu.memory_space<vmem>>, vector<1x128xf32>
      tpu.vector_store %arg6[%c5_93, %c384_94], %134 {strides = array<i32>} : memref<8x512xf32, #tpu.memory_space<vmem>>, vector<1x128xf32>,
      %c6_i32 = arith.constant 6 : i32
      %136 = arith.addi %9, %c6_i32 : i32
      %c1_95 = arith.constant 1 : index
      %137 = arith.index_cast %136 : i32 to index
      %138 = memref.load %arg1[%c1_95, %137] : memref<5x32xi32, #tpu.memory_space<smem>>
      %139 = arith.index_cast %138 : i32 to index
      %c0_96 = arith.constant 0 : index
      %140 = vector.load %arg4[%139, %c0_96] : memref<16x128xf32, #tpu.memory_space<vmem>>, vector<1x128xf32>
      %c6 = arith.constant 6 : index
      %c0_97 = arith.constant 0 : index
      %141 = vector.load %arg6[%c6, %c0_97] : memref<8x512xf32, #tpu.memory_space<vmem>>, vector<1x128xf32>
      tpu.vector_store %arg6[%c6, %c0_97], %140 {strides = array<i32>} : memref<8x512xf32, #tpu.memory_space<vmem>>, vector<1x128xf32>,
      %c2_98 = arith.constant 2 : index
      %142 = arith.index_cast %136 : i32 to index
      %143 = memref.load %arg1[%c2_98, %142] : memref<5x32xi32, #tpu.memory_space<smem>>
      %144 = arith.index_cast %143 : i32 to index
      %c0_99 = arith.constant 0 : index
      %145 = vector.load %arg4[%144, %c0_99] : memref<16x128xf32, #tpu.memory_space<vmem>>, vector<1x128xf32>
      %c6_100 = arith.constant 6 : index
      %c128_101 = arith.constant 128 : index
      %146 = vector.load %arg6[%c6_100, %c128_101] : memref<8x512xf32, #tpu.memory_space<vmem>>, vector<1x128xf32>
      tpu.vector_store %arg6[%c6_100, %c128_101], %145 {strides = array<i32>} : memref<8x512xf32, #tpu.memory_space<vmem>>, vector<1x128xf32>,
      %c3_102 = arith.constant 3 : index
      %147 = arith.index_cast %136 : i32 to index
      %148 = memref.load %arg1[%c3_102, %147] : memref<5x32xi32, #tpu.memory_space<smem>>
      %149 = arith.index_cast %148 : i32 to index
      %c0_103 = arith.constant 0 : index
      %150 = vector.load %arg4[%149, %c0_103] : memref<16x128xf32, #tpu.memory_space<vmem>>, vector<1x128xf32>
      %c6_104 = arith.constant 6 : index
      %c256_105 = arith.constant 256 : index
      %151 = vector.load %arg6[%c6_104, %c256_105] : memref<8x512xf32, #tpu.memory_space<vmem>>, vector<1x128xf32>
      tpu.vector_store %arg6[%c6_104, %c256_105], %150 {strides = array<i32>} : memref<8x512xf32, #tpu.memory_space<vmem>>, vector<1x128xf32>,
      %c4_106 = arith.constant 4 : index
      %152 = arith.index_cast %136 : i32 to index
      %153 = memref.load %arg1[%c4_106, %152] : memref<5x32xi32, #tpu.memory_space<smem>>
      %154 = arith.index_cast %153 : i32 to index
      %c0_107 = arith.constant 0 : index
      %155 = vector.load %arg4[%154, %c0_107] : memref<16x128xf32, #tpu.memory_space<vmem>>, vector<1x128xf32>
      %c6_108 = arith.constant 6 : index
      %c384_109 = arith.constant 384 : index
      %156 = vector.load %arg6[%c6_108, %c384_109] : memref<8x512xf32, #tpu.memory_space<vmem>>, vector<1x128xf32>
      tpu.vector_store %arg6[%c6_108, %c384_109], %155 {strides = array<i32>} : memref<8x512xf32, #tpu.memory_space<vmem>>, vector<1x128xf32>,
      %c7_i32 = arith.constant 7 : i32
      %157 = arith.addi %9, %c7_i32 : i32
      %c1_110 = arith.constant 1 : index
      %158 = arith.index_cast %157 : i32 to index
      %159 = memref.load %arg1[%c1_110, %158] : memref<5x32xi32, #tpu.memory_space<smem>>
      %160 = arith.index_cast %159 : i32 to index
      %c0_111 = arith.constant 0 : index
      %161 = vector.load %arg4[%160, %c0_111] : memref<16x128xf32, #tpu.memory_space<vmem>>, vector<1x128xf32>
      %c7 = arith.constant 7 : index
      %c0_112 = arith.constant 0 : index
      %162 = vector.load %arg6[%c7, %c0_112] : memref<8x512xf32, #tpu.memory_space<vmem>>, vector<1x128xf32>
      tpu.vector_store %arg6[%c7, %c0_112], %161 {strides = array<i32>} : memref<8x512xf32, #tpu.memory_space<vmem>>, vector<1x128xf32>,
      %c2_113 = arith.constant 2 : index
      %163 = arith.index_cast %157 : i32 to index
      %164 = memref.load %arg1[%c2_113, %163] : memref<5x32xi32, #tpu.memory_space<smem>>
      %165 = arith.index_cast %164 : i32 to index
      %c0_114 = arith.constant 0 : index
      %166 = vector.load %arg4[%165, %c0_114] : memref<16x128xf32, #tpu.memory_space<vmem>>, vector<1x128xf32>
      %c7_115 = arith.constant 7 : index
      %c128_116 = arith.constant 128 : index
      %167 = vector.load %arg6[%c7_115, %c128_116] : memref<8x512xf32, #tpu.memory_space<vmem>>, vector<1x128xf32>
      tpu.vector_store %arg6[%c7_115, %c128_116], %166 {strides = array<i32>} : memref<8x512xf32, #tpu.memory_space<vmem>>, vector<1x128xf32>,
      %c3_117 = arith.constant 3 : index
      %168 = arith.index_cast %157 : i32 to index
      %169 = memref.load %arg1[%c3_117, %168] : memref<5x32xi32, #tpu.memory_space<smem>>
      %170 = arith.index_cast %169 : i32 to index
      %c0_118 = arith.constant 0 : index
      %171 = vector.load %arg4[%170, %c0_118] : memref<16x128xf32, #tpu.memory_space<vmem>>, vector<1x128xf32>
      %c7_119 = arith.constant 7 : index
      %c256_120 = arith.constant 256 : index
      %172 = vector.load %arg6[%c7_119, %c256_120] : memref<8x512xf32, #tpu.memory_space<vmem>>, vector<1x128xf32>
      tpu.vector_store %arg6[%c7_119, %c256_120], %171 {strides = array<i32>} : memref<8x512xf32, #tpu.memory_space<vmem>>, vector<1x128xf32>,
      %c4_121 = arith.constant 4 : index
      %173 = arith.index_cast %157 : i32 to index
      %174 = memref.load %arg1[%c4_121, %173] : memref<5x32xi32, #tpu.memory_space<smem>>
      %175 = arith.index_cast %174 : i32 to index
      %c0_122 = arith.constant 0 : index
      %176 = vector.load %arg4[%175, %c0_122] : memref<16x128xf32, #tpu.memory_space<vmem>>, vector<1x128xf32>
      %c7_123 = arith.constant 7 : index
      %c384_124 = arith.constant 384 : index
      %177 = vector.load %arg6[%c7_123, %c384_124] : memref<8x512xf32, #tpu.memory_space<vmem>>, vector<1x128xf32>
      tpu.vector_store %arg6[%c7_123, %c384_124], %176 {strides = array<i32>} : memref<8x512xf32, #tpu.memory_space<vmem>>, vector<1x128xf32>,
      %c0_125 = arith.constant 0 : index
      %c0_126 = arith.constant 0 : index
      %178 = vector.load %arg6[%c0_125, %c0_126] : memref<8x512xf32, #tpu.memory_space<vmem>>, vector<8x512xf32>
      %179 = vector.extract_strided_slice %178 {offsets = [0, 0], sizes = [8, 128], strides = [1, 1]} : vector<8x512xf32> to vector<8x128xf32>
      %180 = vector.extract_strided_slice %178 {offsets = [0, 128], sizes = [8, 128], strides = [1, 1]} : vector<8x512xf32> to vector<8x128xf32>
      %181 = vector.extract_strided_slice %178 {offsets = [0, 256], sizes = [8, 128], strides = [1, 1]} : vector<8x512xf32> to vector<8x128xf32>
      %182 = vector.extract_strided_slice %178 {offsets = [0, 384], sizes = [8, 128], strides = [1, 1]} : vector<8x512xf32> to vector<8x128xf32>
      %c8_i32_127 = arith.constant 8 : i32
      %183 = arith.muli %arg7, %c8_i32_127 : i32
      %184 = tpu.assume_multiple %183, 8 : i32
      %185 = arith.subf %180, %179 : vector<8x128xf32>
      %186 = arith.subf %182, %181 : vector<8x128xf32>
      %187 = arith.subf %185, %186 : vector<8x128xf32>
      %188 = arith.addf %185, %186 : vector<8x128xf32>
      %189 = arith.mulf %188, %3 : vector<8x128xf32>
      %190 = arith.subf %189, %6 : vector<8x128xf32>
      %191 = arith.mulf %187, %190 : vector<8x128xf32>
      %cst = arith.constant dense<0.000000e+00> : vector<8xf32>
      %192 = vector.multi_reduction <add>, %191, %cst [1] : vector<8x128xf32> to vector<8xf32>
      %193 = vector.shape_cast %192 : vector<8xf32> to vector<8x1xf32>
      %cst_128 = arith.constant 0.000000e+00 : f32
      %194 = vector.broadcast %cst_128 : f32 to vector<8x1xf32>
      %195 = arith.maximumf %193, %194 : vector<8x1xf32>
      %196 = math.absf %193 : vector<8x1xf32>
      %cst_129 = arith.constant 0.000000e+00 : f32
      %197 = vector.broadcast %cst_129 : f32 to vector<8x1xf32>
      %198 = arith.subf %197, %196 : vector<8x1xf32>
      %199 = math.exp %198 : vector<8x1xf32>
      %200 = math.log1p %199 : vector<8x1xf32>
      %201 = arith.addf %195, %200 : vector<8x1xf32>
      %202 = arith.index_cast %184 : i32 to index
      %c0_130 = arith.constant 0 : index
      %203 = vector.load %arg5[%202, %c0_130] : memref<16x1xf32, #tpu.memory_space<vmem>>, vector<8x1xf32>
      tpu.vector_store %arg5[%202, %c0_130], %201 {strides = array<i32>} : memref<16x1xf32, #tpu.memory_space<vmem>>, vector<8x1xf32>,
    }
    %c2_i32_3 = arith.constant 2 : i32
    return
  }
  func.func @transform_0(%arg0: i32, %arg1: memref<5x32xi32, #tpu.memory_space<smem>>) -> (i32, i32) {
    %c0_i32 = arith.constant 0 : i32
    %c0_i32_0 = arith.constant 0 : i32
    %c0_i32_1 = arith.constant 0 : i32
    return %c0_i32, %c0_i32_0 : i32, i32
  }
  func.func @transform_1(%arg0: i32, %arg1: memref<5x32xi32, #tpu.memory_space<smem>>) -> (i32, i32) {
    %c0_i32 = arith.constant 0 : i32
    %c0_i32_0 = arith.constant 0 : i32
    %c0_i32_1 = arith.constant 0 : i32
    return %c0_i32, %c0_i32_0 : i32, i32
  }
  func.func @transform_2(%arg0: i32, %arg1: memref<5x32xi32, #tpu.memory_space<smem>>) -> (i32, i32) {
    %c0_i32 = arith.constant 0 : i32
    %c0_i32_0 = arith.constant 0 : i32
    %c0_i32_1 = arith.constant 0 : i32
    return %c0_i32, %c0_i32_0 : i32, i32
  }
  func.func @transform_3(%arg0: i32, %arg1: memref<5x32xi32, #tpu.memory_space<smem>>) -> (i32, i32) {
    %c0_i32 = arith.constant 0 : i32
    %c0_i32_0 = arith.constant 0 : i32
    return %arg0, %c0_i32 : i32, i32
  }
}

</mosaic_0001>

<llo_original>
// kernel: tpu_custom_call.1
$region0: #{tpu_custom_call.1}
  #allocation0 [shape = 'u32[]', space=smem, size = 0x4, offset = 0x4, fixed_abs, tag = 'smem constant byte address 0x4 - core index']
  #allocation1 [shape = 'u32[144,128]{1,0:T(1,128)}', space=vmem, size = 0x12000, scoped, tag = 'internal scratch']
  #allocation2 [shape = 'f32[8,512]{1,0:T(8,128)}', space=vmem, size = 0x4000, scoped, tag = 'scratch operand']
  #allocation3 [shape = 's32[1]{0}', space=sflag, size = 0x4, scoped, tag = 'scoped memory for tpu_custom_call.1']
  #allocation4 [shape = 'u8[4096]{0}', space=smem, size = 0x1000, scoped, tag = 'prefetched SMEM operand 0']
  %s0 = inlined_call_operand.hbm [shape: s32[5,32], index: 0, kind: input, shape index: {}]
  %s1 = inlined_call_operand.vmem [shape: f32[1,128], index: 1, kind: input, shape index: {}]
  %s2 = inlined_call_operand.vmem [shape: f32[1,128], index: 2, kind: input, shape index: {}]
  %s3 = inlined_call_operand.hbm [shape: f32[16,128], index: 3, kind: input, shape index: {}]
  %s4 = inlined_call_operand.vmem [shape: f32[32,1], index: 4, kind: output, shape index: {}]
  %s5 = sld [smem:[#allocation0]]
  $region56: #{tpu_custom_call.1} parent=0
    _
  %s7 = ssub.s32 1, %s5
  %s8 = scalar_select 0, %s7, %s5
  %10 = dma.hbm_to_smem %s0, 128, [#allocation4], [#allocation3]
  %11 = dma.done [#allocation3], 128
  %12 = sfence
  $region1: #{tpu_custom_call.1} parent=0
    #allocation5 [shape = 'u8[8192]{0}', space=vmem, size = 0x2000, scoped, tag = 'input window, operand 3, single buffered']
    #allocation6 [shape = 's32[2]{0}', space=sflag, size = 0x8, scoped, tag = 'scoped memory for tpu_custom_call.1']
    %13 = vsyncpa [#allocation6], 0
    loop: start=0, step=1, limit=4
    $region2: #{tpu_custom_call.1} parent=1 // loop_pre_header
      _
    $region3: #{tpu_custom_call.1} parent=1 // loop_header
      %s15 = sphi 0, %s19
      %p16 = scmp.ge.s32.totalorder %s15, 4
      %s23 = sphi 0, %s23
      %s25 = sphi 0, %s23
      %s26 = sphi 0, %s25
      %s40 = sphi 0, %s26
      %s44 = sphi 0, %s44
      %s46 = sphi 0, %s44
      %s47 = sphi 0, %s46
      %s61 = sphi 0, %s47
      %s65 = sphi 0, %s65
      %s67 = sphi 0, %s65
      %s68 = sphi 0, %s67
      %s82 = sphi 0, %s68
      %s88 = sphi 0, %s90
      %s91 = sphi 0, %s88
      %s92 = sphi 0, %s91
      %s108 = sphi 0, %s92
    $region4: #{tpu_custom_call.1} parent=1 // loop_header_branch
      %18 = sbr.rel (%p16) target = $region8
    $region5: #{tpu_custom_call.1} parent=1 // loop_body
      %s20 = ssub.s32 %s15, 1
      %s21 = ssub.s32 %s15, 2
      %s22 = sadd.s32 %s15, 1
      %s24 = sadd.s32 %s23, 1
      %p27 = scmp.eq.s32.totalorder %s15, 1
      %p28 = scmp.ne.s32.totalorder %s23, %s25
      %p29 = scmp.eq.s32.totalorder %s15, 0
      %p30 = por %p28, %p29
      %p31 = scmp.ne.s32.totalorder %s23, %s25
      %p32 = scmp.eq.s32.totalorder %s20, 1
      %p33 = por %p31, %p32
      %p34 = scmp.ne.s32.totalorder %s25, %s26
      %p35 = scmp.eq.s32.totalorder %s20, 0
      %p36 = por %p34, %p35
      %p37 = scmp.ne.s32.totalorder %s25, %s26
      %p38 = scmp.eq.s32.totalorder %s21, 1
      %p39 = por %p37, %p38
      %p41 = scmp.ne.s32.totalorder %s26, %s40
      %p42 = scmp.eq.s32.totalorder %s21, 0
      %p43 = por %p41, %p42
      %s45 = sadd.s32 %s44, 1
      %p48 = scmp.eq.s32.totalorder %s15, 1
      %p49 = scmp.ne.s32.totalorder %s44, %s46
      %p50 = scmp.eq.s32.totalorder %s15, 0
      %p51 = por %p49, %p50
      %p52 = scmp.ne.s32.totalorder %s44, %s46
      %p53 = scmp.eq.s32.totalorder %s20, 1
      %p54 = por %p52, %p53
      %p55 = scmp.ne.s32.totalorder %s46, %s47
      %p56 = scmp.eq.s32.totalorder %s20, 0
      %p57 = por %p55, %p56
      %p58 = scmp.ne.s32.totalorder %s46, %s47
      %p59 = scmp.eq.s32.totalorder %s21, 1
      %p60 = por %p58, %p59
      %p62 = scmp.ne.s32.totalorder %s47, %s61
      %p63 = scmp.eq.s32.totalorder %s21, 0
      %p64 = por %p62, %p63
      %s66 = sadd.s32 %s65, 1
      %p69 = scmp.eq.s32.totalorder %s15, 1
      %p70 = scmp.ne.s32.totalorder %s65, %s67
      %p71 = scmp.eq.s32.totalorder %s15, 0
      %p72 = por %p70, %p71
      %p73 = scmp.ne.s32.totalorder %s65, %s67
      %p74 = scmp.eq.s32.totalorder %s20, 1
      %p75 = por %p73, %p74
      %p76 = scmp.ne.s32.totalorder %s67, %s68
      %p77 = scmp.eq.s32.totalorder %s20, 0
      %p78 = por %p76, %p77
      %p79 = scmp.ne.s32.totalorder %s67, %s68
      %p80 = scmp.eq.s32.totalorder %s21, 1
      %p81 = por %p79, %p80
      %p83 = scmp.ne.s32.totalorder %s68, %s82
      %p84 = scmp.eq.s32.totalorder %s21, 0
      %p85 = por %p83, %p84
      %s86 = ssub.s32 %s15, %s22
      %p87 = scmp.eq.s32.totalorder %s86, 0
      %s89 = sadd.s32 %s88, 1
      %s90 = scalar_select %p87, %s88, %s89
      %p93 = pneg %p87
      %p94 = scmp.eq.s32.totalorder %s15, 1
      %p95 = por %p93, %p94
      %p96 = scmp.ne.s32.totalorder %s88, %s91
      %p97 = scmp.eq.s32.totalorder %s15, 0
      %p98 = por %p96, %p97
      %p99 = scmp.ne.s32.totalorder %s88, %s91
      %p100 = scmp.eq.s32.totalorder %s20, 1
      %p101 = por %p99, %p100
      %p102 = scmp.ne.s32.totalorder %s91, %s92
      %p103 = scmp.eq.s32.totalorder %s20, 0
      %p104 = por %p102, %p103
      %p105 = scmp.ne.s32.totalorder %s91, %s92
      %p106 = scmp.eq.s32.totalorder %s21, 1
      %p107 = por %p105, %p106
      %p109 = scmp.ne.s32.totalorder %s92, %s108
      %p110 = scmp.eq.s32.totalorder %s21, 0
      %p111 = por %p109, %p110
      %p112 = scmp.le.s32.totalorder 1, %s15
      %p113 = scmp.lt.s32.totalorder %s15, 3
      %p114 = pnand %p112, %p113
      %p115 = pneg %p114
      // Predicated region
      $region9: #{tpu_custom_call.1} parent=5 // pred_check
        _
      $region10: #{tpu_custom_call.1} parent=5 // pred_check_branch
        %117 = sbr.rel (%p114) target = $region12
      $region11: #{tpu_custom_call.1} parent=5 // pred_region
        %s118 = ssub.s32 %s15, 1
        // Predicated region
        $region13: #{tpu_custom_call.1} parent=11 // pred_check
          %p119 = pneg %p36
        $region14: #{tpu_custom_call.1} parent=11 // pred_check_branch
          %121 = sbr.rel (%p119) target = $region16
        $region15: #{tpu_custom_call.1} parent=11 // pred_region
          _
        $region16: #{tpu_custom_call.1} parent=11 // pred_fallthru
          _
        // Predicated region
        $region17: #{tpu_custom_call.1} parent=11 // pred_check
          %p122 = pneg %p57
        $region18: #{tpu_custom_call.1} parent=11 // pred_check_branch
          %124 = sbr.rel (%p122) target = $region20
        $region19: #{tpu_custom_call.1} parent=11 // pred_region
          _
        $region20: #{tpu_custom_call.1} parent=11 // pred_fallthru
          _
        // Predicated region
        $region21: #{tpu_custom_call.1} parent=11 // pred_check
          %p125 = pneg %p78
        $region22: #{tpu_custom_call.1} parent=11 // pred_check_branch
          %127 = sbr.rel (%p125) target = $region24
        $region23: #{tpu_custom_call.1} parent=11 // pred_region
          %s129 = ssub.s32 256, 256
          %130 = vsyncadd [#allocation6], %s129
          %s131 = sshll.u32 [#allocation5], 4
          %s132 = int_to_ptr.vmem [resolvable:$true] %s131
          %137 = dma.hbm_to_vmem [thread:$0]  %s3, 256, %s132, [#allocation6], 128, 128, 8
        $region24: #{tpu_custom_call.1} parent=11 // pred_fallthru
          _
      $region12: #{tpu_custom_call.1} parent=5 // pred_fallthru
        _
      %p138 = scmp.lt.s32.totalorder %s15, 2
      // Predicated region
      $region25: #{tpu_custom_call.1} parent=5 // pred_check
        %p139 = pneg %p138
      $region26: #{tpu_custom_call.1} parent=5 // pred_check_branch
        %141 = sbr.rel (%p139) target = $region28
      $region27: #{tpu_custom_call.1} parent=5 // pred_region
        _
      $region28: #{tpu_custom_call.1} parent=5 // pred_fallthru
        _
      %p142 = scmp.le.s32.totalorder 1, %s15
      %p143 = scmp.lt.s32.totalorder %s15, 3
      %p144 = pnand %p142, %p143
      %p145 = pneg %p144
      // Predicated region
      $region29: #{tpu_custom_call.1} parent=5 // pred_check
        _
      $region30: #{tpu_custom_call.1} parent=5 // pred_check_branch
        %147 = sbr.rel (%p144) target = $region32
      $region31: #{tpu_custom_call.1} parent=5 // pred_region
        %s148 = ssub.s32 %s15, 1
        // Predicated region
        $region33: #{tpu_custom_call.1} parent=31 // pred_check
          %p149 = pneg %p78
        $region34: #{tpu_custom_call.1} parent=31 // pred_check_branch
          %151 = sbr.rel (%p149) target = $region36
        $region35: #{tpu_custom_call.1} parent=31 // pred_region
          %152 = dma.done [#allocation6], 256
        $region36: #{tpu_custom_call.1} parent=31 // pred_fallthru
          _
        %p153 = pneg %p36
        %p154 = pneg %p33
        %p155 = pneg %p57
        %p156 = pneg %p54
        %p157 = pneg %p78
        %p158 = pneg %p75
        %p159 = pneg %p104
        %p160 = pneg %p101
        %s161 = smul.u32 2, %s20
        %p162 = scmp.lt.s32.totalorder %s161, 3
        %s163 = scalar_select %p162, %s161, 3
        %s164 = smul.addr %s163, 8
        %s165 = scalar_lea.vmem %s4, %s164
        %s166 = smul.u32 2, %s20
        %p167 = scmp.lt.s32.totalorder %s166, 3
        %s168 = scalar_select %p167, %s166, 3
        %s169 = smul.addr %s168, 8
        %s170 = scalar_lea.vmem %s4, %s169
        %s171 = smul.u32 2, %s20
        %s172 = smul.u32 %s20, 16
        %v173 = vld [vmem:[%s1] sm:$0x1]
        %v175 = vlaneseq
        %v176 = vshrl.u32 %v175, 7
        %v177 = vsub.s32 0, %v176
        %v178 = vrot.slane %v173, %v177
        %v180 = vld [vmem:[%s2] sm:$0x1]
        %v182 = vlaneseq
        %v183 = vshrl.u32 %v182, 7
        %v184 = vsub.s32 0, %v183
        %v185 = vrot.slane %v180, %v184
        loop: start=0, step=1, limit=2
        $region37: #{tpu_custom_call.1} parent=31 // loop_pre_header
          _
        $region38: #{tpu_custom_call.1} parent=31 // loop_header
          %s188 = sphi 0, %s192
          %p189 = scmp.ge.s32.totalorder %s188, 2
        $region39: #{tpu_custom_call.1} parent=31 // loop_header_branch
          %191 = sbr.rel (%p189) target = $region43
        $region40: #{tpu_custom_call.1} parent=31 // loop_body
          %s193 = smul.u32 %s188, 8
          %s194 = sadd.s32 %s172, %s193
          %s195 = sshra.s32 %s194, 7
          %s196 = sand.u32 %s194, 127
          %s197 = sadd.s32 %s195, 1
          %s198 = smul.u32 %s197, 128
          %s199 = sshra.s32 %s194, 7
          %s200 = sand.u32 %s194, 127
          %s201 = sadd.s32 %s198, %s200
          %s202 = sld [smem:[#allocation4 + %s201]]
          %s203 = scalar_lea.vmem [#allocation5], %s202
          %v204 = vld [vmem:[%s203] sm:$0x1]
          %205 = vst [vmem:[#allocation2] sm:$0x1] %v204
          %s206 = sadd.s32 %s195, 2
          %s207 = smul.u32 %s206, 128
          %s208 = sadd.s32 %s207, %s200
          %s209 = sld [smem:[#allocation4 + %s208]]
          %s210 = scalar_lea.vmem [#allocation5], %s209
          %v211 = vld [vmem:[%s210] sm:$0x1]
          %212 = vst [vmem:[#allocation2 + $0x8] sm:$0x1] %v211
          %s213 = sadd.s32 %s195, 3
          %s214 = smul.u32 %s213, 128
          %s215 = sadd.s32 %s214, %s200
          %s216 = sld [smem:[#allocation4 + %s215]]
          %s217 = scalar_lea.vmem [#allocation5], %s216
          %v218 = vld [vmem:[%s217] sm:$0x1]
          %219 = vst [vmem:[#allocation2 + $0x10] sm:$0x1] %v218
          %s220 = sadd.s32 %s195, 4
          %s221 = smul.u32 %s220, 128
          %s222 = sadd.s32 %s221, %s200
          %s223 = sld [smem:[#allocation4 + %s222]]
          %s224 = scalar_lea.vmem [#allocation5], %s223
          %v225 = vld [vmem:[%s224] sm:$0x1]
          %226 = vst [vmem:[#allocation2 + $0x18] sm:$0x1] %v225
          %s227 = sadd.s32 %s194, 1
          %s228 = sshra.s32 %s227, 7
          %s229 = sand.u32 %s227, 127
          %s230 = sadd.s32 %s228, 1
          %s231 = smul.u32 %s230, 128
          %s232 = sshra.s32 %s227, 7
          %s233 = sand.u32 %s227, 127
          %s234 = sadd.s32 %s231, %s233
          %s235 = sld [smem:[#allocation4 + %s234]]
          %s236 = scalar_lea.vmem [#allocation5], %s235
          %v237 = vld [vmem:[%s236] sm:$0x1]
          %238 = vst [vmem:[#allocation2 + $0x1] sm:$0x1] %v237
          %s239 = sadd.s32 %s228, 2
          %s240 = smul.u32 %s239, 128
          %s241 = sadd.s32 %s240, %s233
          %s242 = sld [smem:[#allocation4 + %s241]]
          %s243 = scalar_lea.vmem [#allocation5], %s242
          %v244 = vld [vmem:[%s243] sm:$0x1]
          %245 = vst [vmem:[#allocation2 + $0x9] sm:$0x1] %v244
          %s246 = sadd.s32 %s228, 3
          %s247 = smul.u32 %s246, 128
          %s248 = sadd.s32 %s247, %s233
          %s249 = sld [smem:[#allocation4 + %s248]]
          %s250 = scalar_lea.vmem [#allocation5], %s249
          %v251 = vld [vmem:[%s250] sm:$0x1]
          %252 = vst [vmem:[#allocation2 + $0x11] sm:$0x1] %v251
          %s253 = sadd.s32 %s228, 4
          %s254 = smul.u32 %s253, 128
          %s255 = sadd.s32 %s254, %s233
          %s256 = sld [smem:[#allocation4 + %s255]]
          %s257 = scalar_lea.vmem [#allocation5], %s256
          %v258 = vld [vmem:[%s257] sm:$0x1]
          %259 = vst [vmem:[#allocation2 + $0x19] sm:$0x1] %v258
          %s260 = sadd.s32 %s194, 2
          %s261 = sshra.s32 %s260, 7
          %s262 = sand.u32 %s260, 127
          %s263 = sadd.s32 %s261, 1
          %s264 = smul.u32 %s263, 128
          %s265 = sshra.s32 %s260, 7
          %s266 = sand.u32 %s260, 127
          %s267 = sadd.s32 %s264, %s266
          %s268 = sld [smem:[#allocation4 + %s267]]
          %s269 = scalar_lea.vmem [#allocation5], %s268
          %v270 = vld [vmem:[%s269] sm:$0x1]
          %271 = vst [vmem:[#allocation2 + $0x2] sm:$0x1] %v270
          %s272 = sadd.s32 %s261, 2
          %s273 = smul.u32 %s272, 128
          %s274 = sadd.s32 %s273, %s266
          %s275 = sld [smem:[#allocation4 + %s274]]
          %s276 = scalar_lea.vmem [#allocation5], %s275
          %v277 = vld [vmem:[%s276] sm:$0x1]
          %278 = vst [vmem:[#allocation2 + $0xa] sm:$0x1] %v277
          %s279 = sadd.s32 %s261, 3
          %s280 = smul.u32 %s279, 128
          %s281 = sadd.s32 %s280, %s266
          %s282 = sld [smem:[#allocation4 + %s281]]
          %s283 = scalar_lea.vmem [#allocation5], %s282
          %v284 = vld [vmem:[%s283] sm:$0x1]
          %285 = vst [vmem:[#allocation2 + $0x12] sm:$0x1] %v284
          %s286 = sadd.s32 %s261, 4
          %s287 = smul.u32 %s286, 128
          %s288 = sadd.s32 %s287, %s266
          %s289 = sld [smem:[#allocation4 + %s288]]
          %s290 = scalar_lea.vmem [#allocation5], %s289
          %v291 = vld [vmem:[%s290] sm:$0x1]
          %292 = vst [vmem:[#allocation2 + $0x1a] sm:$0x1] %v291
          %s293 = sadd.s32 %s194, 3
          %s294 = sshra.s32 %s293, 7
          %s295 = sand.u32 %s293, 127
          %s296 = sadd.s32 %s294, 1
          %s297 = smul.u32 %s296, 128
          %s298 = sshra.s32 %s293, 7
          %s299 = sand.u32 %s293, 127
          %s300 = sadd.s32 %s297, %s299
          %s301 = sld [smem:[#allocation4 + %s300]]
          %s302 = scalar_lea.vmem [#allocation5], %s301
          %v303 = vld [vmem:[%s302] sm:$0x1]
          %304 = vst [vmem:[#allocation2 + $0x3] sm:$0x1] %v303
          %s305 = sadd.s32 %s294, 2
          %s306 = smul.u32 %s305, 128
          %s307 = sadd.s32 %s306, %s299
          %s308 = sld [smem:[#allocation4 + %s307]]
          %s309 = scalar_lea.vmem [#allocation5], %s308
          %v310 = vld [vmem:[%s309] sm:$0x1]
          %311 = vst [vmem:[#allocation2 + $0xb] sm:$0x1] %v310
          %s312 = sadd.s32 %s294, 3
          %s313 = smul.u32 %s312, 128
          %s314 = sadd.s32 %s313, %s299
          %s315 = sld [smem:[#allocation4 + %s314]]
          %s316 = scalar_lea.vmem [#allocation5], %s315
          %v317 = vld [vmem:[%s316] sm:$0x1]
          %318 = vst [vmem:[#allocation2 + $0x13] sm:$0x1] %v317
          %s319 = sadd.s32 %s294, 4
          %s320 = smul.u32 %s319, 128
          %s321 = sadd.s32 %s320, %s299
          %s322 = sld [smem:[#allocation4 + %s321]]
          %s323 = scalar_lea.vmem [#allocation5], %s322
          %v324 = vld [vmem:[%s323] sm:$0x1]
          %325 = vst [vmem:[#allocation2 + $0x1b] sm:$0x1] %v324
          %s326 = sadd.s32 %s194, 4
          %s327 = sshra.s32 %s326, 7
          %s328 = sand.u32 %s326, 127
          %s329 = sadd.s32 %s327, 1
          %s330 = smul.u32 %s329, 128
          %s331 = sshra.s32 %s326, 7
          %s332 = sand.u32 %s326, 127
          %s333 = sadd.s32 %s330, %s332
          %s334 = sld [smem:[#allocation4 + %s333]]
          %s335 = scalar_lea.vmem [#allocation5], %s334
          %v336 = vld [vmem:[%s335] sm:$0x1]
          %337 = vst [vmem:[#allocation2 + $0x4] sm:$0x1] %v336
          %s338 = sadd.s32 %s327, 2
          %s339 = smul.u32 %s338, 128
          %s340 = sadd.s32 %s339, %s332
          %s341 = sld [smem:[#allocation4 + %s340]]
          %s342 = scalar_lea.vmem [#allocation5], %s341
          %v343 = vld [vmem:[%s342] sm:$0x1]
          %344 = vst [vmem:[#allocation2 + $0xc] sm:$0x1] %v343
          %s345 = sadd.s32 %s327, 3
          %s346 = smul.u32 %s345, 128
          %s347 = sadd.s32 %s346, %s332
          %s348 = sld [smem:[#allocation4 + %s347]]
          %s349 = scalar_lea.vmem [#allocation5], %s348
          %v350 = vld [vmem:[%s349] sm:$0x1]
          %351 = vst [vmem:[#allocation2 + $0x14] sm:$0x1] %v350
          %s352 = sadd.s32 %s327, 4
          %s353 = smul.u32 %s352, 128
          %s354 = sadd.s32 %s353, %s332
          %s355 = sld [smem:[#allocation4 + %s354]]
          %s356 = scalar_lea.vmem [#allocation5], %s355
          %v357 = vld [vmem:[%s356] sm:$0x1]
          %358 = vst [vmem:[#allocation2 + $0x1c] sm:$0x1] %v357
          %s359 = sadd.s32 %s194, 5
          %s360 = sshra.s32 %s359, 7
          %s361 = sand.u32 %s359, 127
          %s362 = sadd.s32 %s360, 1
          %s363 = smul.u32 %s362, 128
          %s364 = sshra.s32 %s359, 7
          %s365 = sand.u32 %s359, 127
          %s366 = sadd.s32 %s363, %s365
          %s367 = sld [smem:[#allocation4 + %s366]]
          %s368 = scalar_lea.vmem [#allocation5], %s367
          %v369 = vld [vmem:[%s368] sm:$0x1]
          %370 = vst [vmem:[#allocation2 + $0x5] sm:$0x1] %v369
          %s371 = sadd.s32 %s360, 2
          %s372 = smul.u32 %s371, 128
          %s373 = sadd.s32 %s372, %s365
          %s374 = sld [smem:[#allocation4 + %s373]]
          %s375 = scalar_lea.vmem [#allocation5], %s374
          %v376 = vld [vmem:[%s375] sm:$0x1]
          %377 = vst [vmem:[#allocation2 + $0xd] sm:$0x1] %v376
          %s378 = sadd.s32 %s360, 3
          %s379 = smul.u32 %s378, 128
          %s380 = sadd.s32 %s379, %s365
          %s381 = sld [smem:[#allocation4 + %s380]]
          %s382 = scalar_lea.vmem [#allocation5], %s381
          %v383 = vld [vmem:[%s382] sm:$0x1]
          %384 = vst [vmem:[#allocation2 + $0x15] sm:$0x1] %v383
          %s385 = sadd.s32 %s360, 4
          %s386 = smul.u32 %s385, 128
          %s387 = sadd.s32 %s386, %s365
          %s388 = sld [smem:[#allocation4 + %s387]]
          %s389 = scalar_lea.vmem [#allocation5], %s388
          %v390 = vld [vmem:[%s389] sm:$0x1]
          %391 = vst [vmem:[#allocation2 + $0x1d] sm:$0x1] %v390
          %s392 = sadd.s32 %s194, 6
          %s393 = sshra.s32 %s392, 7
          %s394 = sand.u32 %s392, 127
          %s395 = sadd.s32 %s393, 1
          %s396 = smul.u32 %s395, 128
          %s397 = sshra.s32 %s392, 7
          %s398 = sand.u32 %s392, 127
          %s399 = sadd.s32 %s396, %s398
          %s400 = sld [smem:[#allocation4 + %s399]]
          %s401 = scalar_lea.vmem [#allocation5], %s400
          %v402 = vld [vmem:[%s401] sm:$0x1]
          %403 = vst [vmem:[#allocation2 + $0x6] sm:$0x1] %v402
          %s404 = sadd.s32 %s393, 2
          %s405 = smul.u32 %s404, 128
          %s406 = sadd.s32 %s405, %s398
          %s407 = sld [smem:[#allocation4 + %s406]]
          %s408 = scalar_lea.vmem [#allocation5], %s407
          %v409 = vld [vmem:[%s408] sm:$0x1]
          %410 = vst [vmem:[#allocation2 + $0xe] sm:$0x1] %v409
          %s411 = sadd.s32 %s393, 3
          %s412 = smul.u32 %s411, 128
          %s413 = sadd.s32 %s412, %s398
          %s414 = sld [smem:[#allocation4 + %s413]]
          %s415 = scalar_lea.vmem [#allocation5], %s414
          %v416 = vld [vmem:[%s415] sm:$0x1]
          %417 = vst [vmem:[#allocation2 + $0x16] sm:$0x1] %v416
          %s418 = sadd.s32 %s393, 4
          %s419 = smul.u32 %s418, 128
          %s420 = sadd.s32 %s419, %s398
          %s421 = sld [smem:[#allocation4 + %s420]]
          %s422 = scalar_lea.vmem [#allocation5], %s421
          %v423 = vld [vmem:[%s422] sm:$0x1]
          %424 = vst [vmem:[#allocation2 + $0x1e] sm:$0x1] %v423
          %s425 = sadd.s32 %s194, 7
          %s426 = sshra.s32 %s425, 7
          %s427 = sand.u32 %s425, 127
          %s428 = sadd.s32 %s426, 1
          %s429 = smul.u32 %s428, 128
          %s430 = sshra.s32 %s425, 7
          %s431 = sand.u32 %s425, 127
          %s432 = sadd.s32 %s429, %s431
          %s433 = sld [smem:[#allocation4 + %s432]]
          %s434 = scalar_lea.vmem [#allocation5], %s433
          %v435 = vld [vmem:[%s434] sm:$0x1]
          %436 = vst [vmem:[#allocation2 + $0x7] sm:$0x1] %v435
          %s437 = sadd.s32 %s426, 2
          %s438 = smul.u32 %s437, 128
          %s439 = sadd.s32 %s438, %s431
          %s440 = sld [smem:[#allocation4 + %s439]]
          %s441 = scalar_lea.vmem [#allocation5], %s440
          %v442 = vld [vmem:[%s441] sm:$0x1]
          %443 = vst [vmem:[#allocation2 + $0xf] sm:$0x1] %v442
          %s444 = sadd.s32 %s426, 3
          %s445 = smul.u32 %s444, 128
          %s446 = sadd.s32 %s445, %s431
          %s447 = sld [smem:[#allocation4 + %s446]]
          %s448 = scalar_lea.vmem [#allocation5], %s447
          %v449 = vld [vmem:[%s448] sm:$0x1]
          %450 = vst [vmem:[#allocation2 + $0x17] sm:$0x1] %v449
          %s451 = sadd.s32 %s426, 4
          %s452 = smul.u32 %s451, 128
          %s453 = sadd.s32 %s452, %s431
          %s454 = sld [smem:[#allocation4 + %s453]]
          %s455 = scalar_lea.vmem [#allocation5], %s454
          %v456 = vld [vmem:[%s455] sm:$0x1]
          %457 = vst [vmem:[#allocation2 + $0x1f] sm:$0x1] %v456
          %v458 = vld [vmem:[#allocation2] sm:$0xff]
          %v459 = vld [vmem:[#allocation2 + $0x8] sm:$0xff]
          %v460 = vld [vmem:[#allocation2 + $0x10] sm:$0xff]
          %v461 = vld [vmem:[#allocation2 + $0x18] sm:$0xff]
          %v462 = vsub.f32 %v459, %v458
          %v463 = vsub.f32 %v461, %v460
          %v464 = vsub.f32 %v462, %v463
          %v465 = vadd.f32 %v462, %v463
          %v466 = vmul.f32 %v465, %v178
          %v467 = vsub.f32 %v466, %v185
          %v468 = vmul.f32 %v464, %v467
          %469 = vadd.xlane.f32.xlu0 %v468
          %v470 = vpop.xlane.xlu0 %469
          %v471 = vmax.f32 %v470, 0.0
          %v472 = vand.u32 2147483647, %v470
          %v473 = vsub.f32 0.0, %v472
          %v474 = vmul.f32 %v473, 1.442695
          %v475 = vpow.pop %v474
          %v476 = vadd.f32 %v475, 1.0
          %v477 = vlog2.pop %v476
          %v478 = vmul.f32 %v477, 0.6931472
          %v479 = vmul.f32 -0.5, %v475
          %v480 = vadd.f32 %v479, 1.0
          %v481 = vmul.f32 %v480, %v475
          %v482 = vand.u32 2147483647, %v475
          %vm483 = vcmp.lt.f32.partialorder %v482, 0.0004427343
          %v484 = vsel %vm483, %v481, %v478
          %v485 = vadd.f32 %v471, %v484
          %s486 = scalar_lea.vmem %s170, %s193
          %vm487 = vcmask 7168
          %488 = vst.msk [vmem:[%s486] sm:$0xff] %vm487, %v485
        $region41: #{tpu_custom_call.1} parent=31 // loop_footer
          %s192 = sadd.s32 1, %s188
        $region42: #{tpu_custom_call.1} parent=31 // loop_footer_branch
          %187 = sbr.rel target = $region38
        $region43: #{tpu_custom_call.1} parent=31 // loop_exit
          _
        %s489 = smul.u32 2, %s20
        %p490 = scmp.lt.s32.totalorder %s489, 3
        %s491 = scalar_select %p490, %s489, 3
        %s492 = smul.addr %s491, 8
        %s493 = scalar_lea.vmem %s4, %s492
        // Predicated region
        $region44: #{tpu_custom_call.1} parent=31 // pred_check
          %p494 = pneg %p101
        $region45: #{tpu_custom_call.1} parent=31 // pred_check_branch
          %496 = sbr.rel (%p494) target = $region47
        $region46: #{tpu_custom_call.1} parent=31 // pred_region
          %s497 = smul.u32 2, %s20
        $region47: #{tpu_custom_call.1} parent=31 // pred_fallthru
          _
      $region32: #{tpu_custom_call.1} parent=5 // pred_fallthru
        _
      %p498 = scmp.le.s32.totalorder 2, %s15
      // Predicated region
      $region48: #{tpu_custom_call.1} parent=5 // pred_check
        %p499 = pneg %p498
      $region49: #{tpu_custom_call.1} parent=5 // pred_check_branch
        %501 = sbr.rel (%p499) target = $region51
      $region50: #{tpu_custom_call.1} parent=5 // pred_region
        %s502 = ssub.s32 %s15, 2
        // Predicated region
        $region52: #{tpu_custom_call.1} parent=50 // pred_check
          %p503 = pneg %p107
        $region53: #{tpu_custom_call.1} parent=50 // pred_check_branch
          %505 = sbr.rel (%p503) target = $region55
        $region54: #{tpu_custom_call.1} parent=50 // pred_region
          %s506 = smul.u32 2, %s21
          %p507 = scmp.lt.s32.totalorder %s506, 3
          %s508 = scalar_select %p507, %s506, 3
          %s509 = smul.addr %s508, 8
          %s510 = scalar_lea.vmem %s4, %s509
        $region55: #{tpu_custom_call.1} parent=50 // pred_fallthru
          _
      $region51: #{tpu_custom_call.1} parent=5 // pred_fallthru
        _
    $region6: #{tpu_custom_call.1} parent=1 // loop_footer
      %s19 = sadd.s32 1, %s15
    $region7: #{tpu_custom_call.1} parent=1 // loop_footer_branch
      %14 = sbr.rel target = $region3
    $region8: #{tpu_custom_call.1} parent=1 // loop_exit
      _
    %511 = vsyncpa [#allocation6], 1
    %s512 = scalar_lea.sflag [#allocation6], 1
    %513 = vsyncpa %s512, 1

</llo_original>
